<compile_context>
chip_gen: v7x
topology: tpu7x:2x2x1
jax: 0.10.0
libtpu: 0.0.40
codegen_flags: <defaults>
</compile_context>

<pallas_src>
import functools

import jax
import jax.numpy as jnp
from jax import lax
from jax.experimental import pallas as pl
from jax.experimental.pallas import tpu as pltpu


def _squeeze_excite_kernel(x_ref, w1t_ref, b1_ref, w2t_ref, b2_ref, out_ref,
                           acc_ref, *, L, TL, mask_l):
    # x_ref:   (TB, dim, TL)       w1t: (dim, inner)    b1: (1, inner)
    # w2t:     (inner, dim_out)    b2:  (1, dim_out)
    # out_ref: (TB, dim_out)       acc: (TB, dim) f32 scratch
    l = pl.program_id(1)

    @pl.when(l == 0)
    def _():
        acc_ref[...] = jnp.zeros_like(acc_ref)

    x = x_ref[...].astype(jnp.float32)                      # (TB, dim, TL)
    if mask_l:
        # Zero out padded tail positions so they do not pollute the mean.
        pos = l * TL + lax.broadcasted_iota(jnp.int32, x.shape, 2)
        x = jnp.where(pos < L, x, 0.0)

    acc_ref[...] += jnp.sum(x, axis=-1)                     # running sum over L

    @pl.when(l == pl.num_programs(1) - 1)
    def _():
        avg = acc_ref[...] * (1.0 / L)                      # (TB, dim)  global avg pool
        # Conv1d(dim, inner, 1): avg @ W1^T + b1  (W1 pre-transposed in wrapper)
        h = jnp.dot(avg, w1t_ref[...], preferred_element_type=jnp.float32)
        h = h + b1_ref[...]
        h = h * jax.nn.sigmoid(h)                           # SiLU
        # Conv1d(inner, dim_out, 1): h @ W2^T + b2
        g = jnp.dot(h, w2t_ref[...], preferred_element_type=jnp.float32)
        g = g + b2_ref[...]
        out_ref[...] = jax.nn.sigmoid(g).astype(out_ref.dtype)


def squeeze_excite(x, w1, b1, w2, b2, *, max_tl=1024):
    """x: (B, dim, L) -> (B, dim_out, 1). w1: (inner, dim), w2: (dim_out, inner)."""
    B, dim, L = x.shape
    inner, _ = w1.shape
    dim_out, _ = w2.shape

    # L tile: full L if it fits in one lane-dense tile, else a 128-multiple
    # (~1K elems; double-buffered input stays well under scoped VMEM on v7x too).
    TL = L if L <= max_tl else max_tl
    num_l = pl.cdiv(L, TL)
    mask_l = (num_l * TL != L)

    # Batch tile: full B for small batches; 8-row (sublane-aligned) tiles when B
    # divides evenly, giving the "parallel" axis real work to shard on v7x.
    TB = 8 if (B > 8 and B % 8 == 0) else B
    num_b = pl.cdiv(B, TB)

    # Pre-transpose weights once in the wrapper (free layout plumbing, keeps the
    # XLU slot clear inside the kernel).
    w1t = jnp.asarray(w1).T                                  # (dim, inner)
    w2t = jnp.asarray(w2).T                                  # (inner, dim_out)
    b1_2d = jnp.asarray(b1).reshape(1, inner)
    b2_2d = jnp.asarray(b2).reshape(1, dim_out)

    kernel = functools.partial(_squeeze_excite_kernel, L=L, TL=TL, mask_l=mask_l)

    out = pl.pallas_call(
        kernel,
        out_shape=jax.ShapeDtypeStruct((B, dim_out), x.dtype),
        grid=(num_b, num_l),
        in_specs=[
            pl.BlockSpec((TB, dim, TL), lambda b, l: (b, 0, l)),
            pl.BlockSpec((dim, inner), lambda b, l: (0, 0)),
            pl.BlockSpec((1, inner), lambda b, l: (0, 0)),
            pl.BlockSpec((inner, dim_out), lambda b, l: (0, 0)),
            pl.BlockSpec((1, dim_out), lambda b, l: (0, 0)),
        ],
        out_specs=pl.BlockSpec((TB, dim_out), lambda b, l: (b, 0)),
        scratch_shapes=[pltpu.VMEM((TB, dim), jnp.float32)],
        compiler_params=pltpu.CompilerParams(
            dimension_semantics=("parallel", "arbitrary"),
            vmem_limit_bytes=64 * 1024 * 1024,
        ),
    )(x, w1t, b1_2d, w2t, b2_2d)

    # PyTorch returns (B, dim_out, 1) (trailing spatial dim of the 1x1 convs).
    return out[:, :, None]


def init_params(key, dim, dim_out, reduction=2, dim_minimum=8):
    inner_dim = max(dim_minimum, dim_out // reduction)
    k1, k2, k3, k4 = jax.random.split(key, 4)
    # Shapes match nn.Conv1d(dim, inner, 1) etc. with the size-1 kernel axis squeezed.
    w1 = jax.random.normal(k1, (inner_dim, dim), jnp.float32) * 0.1
    b1 = jax.random.normal(k2, (inner_dim,), jnp.float32) * 0.1
    w2 = jax.random.normal(k3, (dim_out, inner_dim), jnp.float32) * 0.1
    b2 = jax.random.normal(k4, (dim_out,), jnp.float32) * 0.1
    return w1, b1, w2, b2


def reference(x, w1, b1, w2, b2):
    avg = jnp.mean(x, axis=-1)                      # (B, dim)
    h = avg @ w1.T + b1
    h = h * jax.nn.sigmoid(h)                       # SiLU
    g = h @ w2.T + b2
    return jax.nn.sigmoid(g)[:, :, None]            # (B, dim_out, 1)


if __name__ == "__main__":
    key = jax.random.PRNGKey(0)
    kx, kp, kx2 = jax.random.split(key, 3)

    # Small-shape check (single L tile path).
    B, dim, dim_out, L = 2, 4, 4, 16
    x = jax.random.normal(kx, (B, dim, L), jnp.float32)
    w1, b1, w2, b2 = init_params(kp, dim, dim_out)

    out = jax.block_until_ready(squeeze_excite(x, w1, b1, w2, b2))
    ref = reference(x, w1, b1, w2, b2)
    assert out.shape == (B, dim_out, 1), out.shape
    assert jnp.allclose(out, ref, atol=1e-5, rtol=1e-5), (out, ref)

    # Multi-tile + ragged-tail check (exercises the pipelined reduction + mask).
    L2 = 2500  # 3 tiles of 1024 with a partial tail
    x2 = jax.random.normal(kx2, (B, dim, L2), jnp.float32)
    out2 = jax.block_until_ready(squeeze_excite(x2, w1, b1, w2, b2))
    ref2 = reference(x2, w1, b1, w2, b2)
    assert out2.shape == (B, dim_out, 1), out2.shape
    assert jnp.allclose(out2, ref2, atol=1e-5, rtol=1e-5), (out2, ref2)

    print("KERNEL_OK")
</pallas_src>

<mosaic_0001>
module attributes {stable_mosaic.version = 11 : i64} {
  func.func @_squeeze_excite_kernel(%arg0: i32, %arg1: i32, %arg2: memref<2x4x16xf32, #tpu.memory_space<vmem>>, %arg3: memref<4x8xf32, #tpu.memory_space<vmem>>, %arg4: memref<1x8xf32, #tpu.memory_space<vmem>>, %arg5: memref<8x4xf32, #tpu.memory_space<vmem>>, %arg6: memref<1x4xf32, #tpu.memory_space<vmem>>, %arg7: memref<2x4xf32, #tpu.memory_space<vmem>>, %arg8: memref<2x4xf32, #tpu.memory_space<vmem>>) attributes {dimension_semantics = [#tpu.dimension_semantics<parallel>, #tpu.dimension_semantics<arbitrary>], iteration_bounds = array<i64: 1, 1>, scalar_prefetch = 0 : i64, scratch_operands = 1 : i64, tpu.core_type = #tpu.core_type<tc>, window_params = [{transform_indices = @transform_0, window_bounds = array<i64: 2, 4, 16>}, {pipeline_mode = #tpu.pipeline_mode<synchronous>, transform_indices = @transform_1, window_bounds = array<i64: 4, 8>}, {pipeline_mode = #tpu.pipeline_mode<synchronous>, transform_indices = @transform_2, window_bounds = array<i64: 1, 8>}, {pipeline_mode = #tpu.pipeline_mode<synchronous>, transform_indices = @transform_3, window_bounds = array<i64: 8, 4>}, {pipeline_mode = #tpu.pipeline_mode<synchronous>, transform_indices = @transform_4, window_bounds = array<i64: 1, 4>}, {transform_indices = @transform_5, window_bounds = array<i64: 2, 4>}]} {
    %c0_i32 = arith.constant 0 : i32
    %0 = arith.cmpi eq, %arg1, %c0_i32 : i32
    %1 = arith.extui %0 : i1 to i32
    %c0_i32_0 = arith.constant 0 : i32
    %2 = arith.cmpi ne, %1, %c0_i32_0 : i32
    scf.if %2 {
      %cst_9 = arith.constant 0.000000e+00 : f32
      %11 = vector.broadcast %cst_9 : f32 to vector<2x4xf32>
      %c0_10 = arith.constant 0 : index
      %c0_11 = arith.constant 0 : index
      %12 = vector.load %arg8[%c0_10, %c0_11] : memref<2x4xf32, #tpu.memory_space<vmem>>, vector<2x4xf32>
      tpu.vector_store %arg8[%c0_10, %c0_11], %11 {strides = array<i32>} : memref<2x4xf32, #tpu.memory_space<vmem>>, vector<2x4xf32>,
    } else {
    }
    %c0 = arith.constant 0 : index
    %c0_1 = arith.constant 0 : index
    %c0_2 = arith.constant 0 : index
    %3 = vector.load %arg2[%c0, %c0_1, %c0_2] : memref<2x4x16xf32, #tpu.memory_space<vmem>>, vector<2x4x16xf32>
    %c0_3 = arith.constant 0 : index
    %c0_4 = arith.constant 0 : index
    %4 = vector.load %arg8[%c0_3, %c0_4] : memref<2x4xf32, #tpu.memory_space<vmem>>, vector<2x4xf32>
    %cst = arith.constant dense<0.000000e+00> : vector<2x4xf32>
    %5 = vector.multi_reduction <add>, %3, %cst [2] : vector<2x4x16xf32> to vector<2x4xf32>
    %6 = arith.addf %4, %5 : vector<2x4xf32>
    %c0_5 = arith.constant 0 : index
    %c0_6 = arith.constant 0 : index
    %7 = vector.load %arg8[%c0_5, %c0_6] : memref<2x4xf32, #tpu.memory_space<vmem>>, vector<2x4xf32>
    tpu.vector_store %arg8[%c0_5, %c0_6], %6 {strides = array<i32>} : memref<2x4xf32, #tpu.memory_space<vmem>>, vector<2x4xf32>,
    %c0_i32_7 = arith.constant 0 : i32
    %8 = arith.cmpi eq, %arg1, %c0_i32_7 : i32
    %9 = arith.extui %8 : i1 to i32
    %c0_i32_8 = arith.constant 0 : i32
    %10 = arith.cmpi ne, %9, %c0_i32_8 : i32
    scf.if %10 {
      %c0_9 = arith.constant 0 : index
      %c0_10 = arith.constant 0 : index
      %11 = vector.load %arg8[%c0_9, %c0_10] : memref<2x4xf32, #tpu.memory_space<vmem>>, vector<2x4xf32>
      %cst_11 = arith.constant 6.250000e-02 : f32
      %12 = vector.broadcast %cst_11 : f32 to vector<2x4xf32>
      %13 = arith.mulf %11, %12 : vector<2x4xf32>
      %c0_12 = arith.constant 0 : index
      %c0_13 = arith.constant 0 : index
      %14 = vector.load %arg3[%c0_12, %c0_13] : memref<4x8xf32, #tpu.memory_space<vmem>>, vector<4x8xf32>
      %cst_14 = arith.constant dense<0.000000e+00> : vector<2x8xf32>
      %15 = tpu.matmul %13, %14, %cst_14 {dimension_numbers = #tpu.dot_dimension_numbers<[1], [0], [0], [1], [0, 0, 1, 1], [], []>} : vector<2x4xf32>, vector<4x8xf32>, vector<2x8xf32> -> vector<2x8xf32>
      %c0_15 = arith.constant 0 : index
      %c0_16 = arith.constant 0 : index
      %16 = vector.load %arg4[%c0_15, %c0_16] : memref<1x8xf32, #tpu.memory_space<vmem>>, vector<1x8xf32>
      %17 = vector.broadcast %16 : vector<1x8xf32> to vector<2x8xf32>
      %18 = arith.addf %15, %17 : vector<2x8xf32>
      %19 = arith.negf %18 : vector<2x8xf32>
      %20 = math.exp %19 : vector<2x8xf32>
      %cst_17 = arith.constant 1.000000e+00 : f32
      %21 = vector.broadcast %cst_17 : f32 to vector<2x8xf32>
      %22 = arith.addf %21, %20 : vector<2x8xf32>
      %23 = arith.divf %21, %22 : vector<2x8xf32>
      %24 = arith.mulf %18, %23 : vector<2x8xf32>
      %c0_18 = arith.constant 0 : index
      %c0_19 = arith.constant 0 : index
      %25 = vector.load %arg5[%c0_18, %c0_19] : memref<8x4xf32, #tpu.memory_space<vmem>>, vector<8x4xf32>
      %cst_20 = arith.constant dense<0.000000e+00> : vector<2x4xf32>
      %26 = tpu.matmul %24, %25, %cst_20 {dimension_numbers = #tpu.dot_dimension_numbers<[1], [0], [0], [1], [0, 0, 1, 1], [], []>} : vector<2x8xf32>, vector<8x4xf32>, vector<2x4xf32> -> vector<2x4xf32>
      %c0_21 = arith.constant 0 : index
      %c0_22 = arith.constant 0 : index
      %27 = vector.load %arg6[%c0_21, %c0_22] : memref<1x4xf32, #tpu.memory_space<vmem>>, vector<1x4xf32>
      %28 = vector.broadcast %27 : vector<1x4xf32> to vector<2x4xf32>
      %29 = arith.addf %26, %28 : vector<2x4xf32>
      %30 = arith.negf %29 : vector<2x4xf32>
      %31 = math.exp %30 : vector<2x4xf32>
      %cst_23 = arith.constant 1.000000e+00 : f32
      %32 = vector.broadcast %cst_23 : f32 to vector<2x4xf32>
      %33 = arith.addf %32, %31 : vector<2x4xf32>
      %34 = arith.divf %32, %33 : vector<2x4xf32>
      %c0_24 = arith.constant 0 : index
      %c0_25 = arith.constant 0 : index
      %35 = vector.load %arg7[%c0_24, %c0_25] : memref<2x4xf32, #tpu.memory_space<vmem>>, vector<2x4xf32>
      tpu.vector_store %arg7[%c0_24, %c0_25], %34 {strides = array<i32>} : memref<2x4xf32, #tpu.memory_space<vmem>>, vector<2x4xf32>,
    } else {
    }
    return
  }
  func.func @transform_0(%arg0: i32, %arg1: i32) -> (i32, i32, i32) {
    %c0_i32 = arith.constant 0 : i32
    %c0_i32_0 = arith.constant 0 : i32
    return %arg0, %c0_i32, %arg1 : i32, i32, i32
  }
  func.func @transform_1(%arg0: i32, %arg1: i32) -> (i32, i32) {
    %c0_i32 = arith.constant 0 : i32
    %c0_i32_0 = arith.constant 0 : i32
    %c0_i32_1 = arith.constant 0 : i32
    return %c0_i32, %c0_i32_0 : i32, i32
  }
  func.func @transform_2(%arg0: i32, %arg1: i32) -> (i32, i32) {
    %c0_i32 = arith.constant 0 : i32
    %c0_i32_0 = arith.constant 0 : i32
    %c0_i32_1 = arith.constant 0 : i32
    return %c0_i32, %c0_i32_0 : i32, i32
  }
  func.func @transform_3(%arg0: i32, %arg1: i32) -> (i32, i32) {
    %c0_i32 = arith.constant 0 : i32
    %c0_i32_0 = arith.constant 0 : i32
    %c0_i32_1 = arith.constant 0 : i32
    return %c0_i32, %c0_i32_0 : i32, i32
  }
  func.func @transform_4(%arg0: i32, %arg1: i32) -> (i32, i32) {
    %c0_i32 = arith.constant 0 : i32
    %c0_i32_0 = arith.constant 0 : i32
    %c0_i32_1 = arith.constant 0 : i32
    return %c0_i32, %c0_i32_0 : i32, i32
  }
  func.func @transform_5(%arg0: i32, %arg1: i32) -> (i32, i32) {
    %c0_i32 = arith.constant 0 : i32
    %c0_i32_0 = arith.constant 0 : i32
    return %arg0, %c0_i32 : i32, i32
  }
}

</mosaic_0001>

<llo_original>
// kernel: tpu_custom_call.1
$region0: #{tpu_custom_call.1}
  #allocation0 [shape = 'u32[]', space=smem, size = 0x4, offset = 0x4, fixed_abs, tag = 'smem constant byte address 0x4 - core index']
  #allocation1 [shape = 'u32[144,128]{1,0:T(1,128)}', space=vmem, size = 0x12000, scoped, tag = 'internal scratch']
  #allocation2 [shape = 'f32[2,4]{1,0:T(2,128)}', space=vmem, size = 0x400, scoped, tag = 'scratch operand']
  %s0 = inlined_call_operand.hbm [shape: f32[2,4,16], index: 0, kind: input, shape index: {}]
  %s1 = inlined_call_operand.hbm [shape: f32[4,8], index: 1, kind: input, shape index: {}]
  %s2 = inlined_call_operand.hbm [shape: f32[1,8], index: 2, kind: input, shape index: {}]
  %s3 = inlined_call_operand.hbm [shape: f32[8,4], index: 3, kind: input, shape index: {}]
  %s4 = inlined_call_operand.hbm [shape: f32[1,4], index: 4, kind: input, shape index: {}]
  %s5 = inlined_call_operand.hbm [shape: f32[2,4], index: 5, kind: output, shape index: {}]
  %s6 = sld [smem:[#allocation0]]
  $region58: #{tpu_custom_call.1} parent=0
    _
  %s8 = ssub.s32 1, %s6
  %s9 = scalar_select 0, %s8, %s6
  $region1: #{tpu_custom_call.1} parent=0
    #allocation3 [shape = 'u8[4096]{0}', space=vmem, size = 0x1000, scoped, tag = 'input window, operand 0, single buffered']
    #allocation4 [shape = 's32[1]{0}', space=sflag, size = 0x4, scoped, tag = 'scoped memory for tpu_custom_call.1']
    #allocation5 [shape = 's32[1]{0}', space=sflag, size = 0x4, scoped, tag = 'scoped memory for tpu_custom_call.1']
    #allocation6 [shape = 'u8[2048]{0}', space=vmem, size = 0x800, scoped, tag = 'input window, operand 1, single buffered']
    #allocation7 [shape = 's32[1]{0}', space=sflag, size = 0x4, scoped, tag = 'scoped memory for tpu_custom_call.1']
    #allocation8 [shape = 'u8[512]{0}', space=vmem, size = 0x400, scoped, tag = 'input window, operand 2, single buffered']
    #allocation9 [shape = 'u8[4096]{0}', space=vmem, size = 0x1000, scoped, tag = 'input window, operand 3, single buffered']
    #allocation10 [shape = 's32[1]{0}', space=sflag, size = 0x4, scoped, tag = 'scoped memory for tpu_custom_call.1']
    #allocation11 [shape = 'u8[512]{0}', space=vmem, size = 0x400, scoped, tag = 'input window, operand 4, single buffered']
    #allocation12 [shape = 'u8[1024]{0}', space=vmem, size = 0x400, scoped, tag = 'output window, operand 0, single buffered']
    %10 = vsyncpa [#allocation4], 0
    %11 = vsyncpa [#allocation7], 0
    %12 = vsyncpa [#allocation10], 0
    %13 = vsyncpa [#allocation5], 0
    // Predicated region
    $region2: #{tpu_custom_call.1} parent=1 // pred_check
      _
    $region3: #{tpu_custom_call.1} parent=1 // pred_check_branch
      %15 = sbr.rel (0) target = $region5
    $region4: #{tpu_custom_call.1} parent=1 // pred_region
      %s17 = ssub.s32 128, 128
      %18 = vsyncadd [#allocation4], %s17
      %s19 = sshll.u32 [#allocation3], 4
      %s20 = int_to_ptr.vmem [resolvable:$true] %s19
      %25 = dma.hbm_to_vmem [thread:$0]  %s0, 128, %s20, [#allocation4], 64, 64, 4
    $region5: #{tpu_custom_call.1} parent=1 // pred_fallthru
      _
    // Predicated region
    $region6: #{tpu_custom_call.1} parent=1 // pred_check
      _
    $region7: #{tpu_custom_call.1} parent=1 // pred_check_branch
      %27 = sbr.rel (0) target = $region9
    $region8: #{tpu_custom_call.1} parent=1 // pred_region
      %s29 = ssub.s32 64, 64
      %30 = vsyncadd [#allocation7], %s29
      %s32 = sshll.u32 [#allocation6], 4
      %s33 = int_to_ptr.vmem [resolvable:$true] %s32
      %35 = dma.hbm_to_vmem [thread:$0]  %s1, 64, %s33, [#allocation7]
    $region9: #{tpu_custom_call.1} parent=1 // pred_fallthru
      _
    // Predicated region
    $region10: #{tpu_custom_call.1} parent=1 // pred_check
      _
    $region11: #{tpu_custom_call.1} parent=1 // pred_check_branch
      %37 = sbr.rel (0) target = $region13
    $region12: #{tpu_custom_call.1} parent=1 // pred_region
      %s39 = ssub.s32 16, 16
      %40 = vsyncadd [#allocation7], %s39
      %s42 = sshll.u32 [#allocation8], 4
      %s43 = int_to_ptr.vmem [resolvable:$true] %s42
      %45 = dma.hbm_to_vmem [thread:$0]  %s2, 16, %s43, [#allocation7]
    $region13: #{tpu_custom_call.1} parent=1 // pred_fallthru
      _
    // Predicated region
    $region14: #{tpu_custom_call.1} parent=1 // pred_check
      _
    $region15: #{tpu_custom_call.1} parent=1 // pred_check_branch
      %47 = sbr.rel (0) target = $region17
    $region16: #{tpu_custom_call.1} parent=1 // pred_region
      %s49 = ssub.s32 128, 128
      %50 = vsyncadd [#allocation10], %s49
      %s52 = sshll.u32 [#allocation9], 4
      %s53 = int_to_ptr.vmem [resolvable:$true] %s52
      %55 = dma.hbm_to_vmem [thread:$0]  %s3, 128, %s53, [#allocation10]
    $region17: #{tpu_custom_call.1} parent=1 // pred_fallthru
      _
    // Predicated region
    $region18: #{tpu_custom_call.1} parent=1 // pred_check
      _
    $region19: #{tpu_custom_call.1} parent=1 // pred_check_branch
      %57 = sbr.rel (0) target = $region21
    $region20: #{tpu_custom_call.1} parent=1 // pred_region
      %s59 = ssub.s32 16, 16
      %60 = vsyncadd [#allocation10], %s59
      %s62 = sshll.u32 [#allocation11], 4
      %s63 = int_to_ptr.vmem [resolvable:$true] %s62
      %65 = dma.hbm_to_vmem [thread:$0]  %s4, 16, %s63, [#allocation10]
    $region21: #{tpu_custom_call.1} parent=1 // pred_fallthru
      _
    // Predicated region
    $region22: #{tpu_custom_call.1} parent=1 // pred_check
      _
    $region23: #{tpu_custom_call.1} parent=1 // pred_check_branch
      %67 = sbr.rel (0) target = $region25
    $region24: #{tpu_custom_call.1} parent=1 // pred_region
      %68 = dma.done [#allocation4], 128
    $region25: #{tpu_custom_call.1} parent=1 // pred_fallthru
      _
    // Predicated region
    $region26: #{tpu_custom_call.1} parent=1 // pred_check
      _
    $region27: #{tpu_custom_call.1} parent=1 // pred_check_branch
      %70 = sbr.rel (0) target = $region29
    $region28: #{tpu_custom_call.1} parent=1 // pred_region
      %71 = dma.done [#allocation7], 64
    $region29: #{tpu_custom_call.1} parent=1 // pred_fallthru
      _
    // Predicated region
    $region30: #{tpu_custom_call.1} parent=1 // pred_check
      _
    $region31: #{tpu_custom_call.1} parent=1 // pred_check_branch
      %73 = sbr.rel (0) target = $region33
    $region32: #{tpu_custom_call.1} parent=1 // pred_region
      %74 = dma.done [#allocation7], 16
    $region33: #{tpu_custom_call.1} parent=1 // pred_fallthru
      _
    // Predicated region
    $region34: #{tpu_custom_call.1} parent=1 // pred_check
      _
    $region35: #{tpu_custom_call.1} parent=1 // pred_check_branch
      %76 = sbr.rel (0) target = $region37
    $region36: #{tpu_custom_call.1} parent=1 // pred_region
      %77 = dma.done [#allocation10], 128
    $region37: #{tpu_custom_call.1} parent=1 // pred_fallthru
      _
    // Predicated region
    $region38: #{tpu_custom_call.1} parent=1 // pred_check
      _
    $region39: #{tpu_custom_call.1} parent=1 // pred_check_branch
      %79 = sbr.rel (0) target = $region41
    $region40: #{tpu_custom_call.1} parent=1 // pred_region
      %80 = dma.done [#allocation10], 16
    $region41: #{tpu_custom_call.1} parent=1 // pred_fallthru
      _
    %p81 = scmp.eq.s32.totalorder 0, 0
    // Predicated region
    $region42: #{tpu_custom_call.1} parent=1 // pred_check
      %p82 = pneg %p81
    $region43: #{tpu_custom_call.1} parent=1 // pred_check_branch
      %84 = sbr.rel (%p82) target = $region45
    $region44: #{tpu_custom_call.1} parent=1 // pred_region
      %vm85 = vcmask 25600
      %86 = vst.msk [vmem:[#allocation2] sm:$0x3] %vm85, 0.0
    $region45: #{tpu_custom_call.1} parent=1 // pred_fallthru
      _
    %v87 = vld [vmem:[#allocation3] sm:$0xf]
    %v88 = vld [vmem:[#allocation3 + $0x4] sm:$0xf]
    %v89 = vld [vmem:[#allocation2] sm:$0x3]
    %vm90 = vcmask 125952
    %v91 = vsel %vm90, %v87, 0.0
    %92 = vadd.xlane.f32.xlu0 %v91
    %v93 = vpop.xlane.xlu0 %92
    %v94 = vsel %vm90, %v88, 0.0
    %95 = vadd.xlane.f32.xlu0 %v94
    %v96 = vpop.xlane.xlu0 %95
    %v99 = vlaneseq
    %v100 = vand.u32 %v99, 127
    %v101 = vlaneseq
    %v102 = vshrl.u32 %v101, 7
    %v103 = vsub.s32 %v100, %v102
    %v104 = vrot.slane %v93, %v103
    %v105 = vlaneseq
    %v106 = vshrl.u32 %v105, 7
    %v107 = vsub.s32 %v100, %v106
    %v108 = vrot.slane %v96, %v107
    %vm109 = vcmask 1041409
    %v110 = vsel %vm109, %v108, %v104
    %v112 = vadd.f32 %v89, %v110
    %vm113 = vcmask 25600
    %114 = vst.msk [vmem:[#allocation2] sm:$0x3] %vm113, %v112
    // Predicated region
    $region46: #{tpu_custom_call.1} parent=1 // pred_check
      %p115 = pneg %p81
    $region47: #{tpu_custom_call.1} parent=1 // pred_check_branch
      %117 = sbr.rel (%p115) target = $region49
    $region48: #{tpu_custom_call.1} parent=1 // pred_region
      %v118 = vld [vmem:[#allocation2] sm:$0x3]
      %v119 = vmul.f32 %v118, 0.0625
      %v120 = vld [vmem:[#allocation6] sm:$0xf]
      %v121 = vld [vmem:[#allocation8] sm:$0x1]
      %v123 = vlaneseq
      %v124 = vshrl.u32 %v123, 7
      %v125 = vsub.s32 0, %v124
      %v126 = vrot.slane %v121, %v125
      %vm128 = vcmask 31744
      %v130 = vsel %vm128, %v119, 0
      %vm132 = vcmask 1043456
      %v134 = vsel %vm132, %v120, 0
      %136 = vmatprep.subr.mxu0 0.0
      %137 = vmatpush1.msra.mxu0 %v134
      %138 = vmatprep.subr.mxu0 0.0
      %139 = vmatpush1.msra.mxu0 0.0
      %140 = vmatprep.subr.mxu0 0.0
      %141 = vmatpush1.msra.mxu0 0.0
      %142 = vmatprep.subr.mxu0 0.0
      %143 = vmatpush1.msra.mxu0 0.0
      %144 = vmatprep.subr.mxu0 0.0
      %145 = vmatpush1.msra.mxu0 0.0
      %146 = vmatprep.subr.mxu0 0.0
      %147 = vmatpush1.msra.mxu0 0.0
      %148 = vmatprep.subr.mxu0 0.0
      %149 = vmatpush1.msra.mxu0 0.0
      %150 = vmatprep.subr.mxu0 0.0
      %151 = vmatpush1.msra.mxu0 0.0
      %152 = vmatprep.subr.mxu0 0.0
      %153 = vmatpush1.msra.mxu0 0.0
      %154 = vmatprep.subr.mxu0 0.0
      %155 = vmatpush1.msra.mxu0 0.0
      %156 = vmatprep.subr.mxu0 0.0
      %157 = vmatpush1.msra.mxu0 0.0
      %158 = vmatprep.subr.mxu0 0.0
      %159 = vmatpush1.msra.mxu0 0.0
      %160 = vmatprep.subr.mxu0 0.0
      %161 = vmatpush1.msra.mxu0 0.0
      %162 = vmatprep.subr.mxu0 0.0
      %163 = vmatpush1.msra.mxu0 0.0
      %164 = vmatprep.subr.mxu0 0.0
      %165 = vmatpush1.msra.mxu0 0.0
      %166 = vmatprep.subr.mxu0 0.0
      %167 = vmatpush1.msra.mxu0 0.0
      %168 = vmatprep.subr.mxu0 0.0
      %169 = vmatpush1.msra.mxu0 0.0
      %170 = vmatprep.subr.mxu0 0.0
      %171 = vmatpush1.msra.mxu0 0.0
      %172 = vmatprep.subr.mxu0 0.0
      %173 = vmatpush1.msra.mxu0 0.0
      %174 = vmatprep.subr.mxu0 0.0
      %175 = vmatpush1.msra.mxu0 0.0
      %176 = vmatprep.subr.mxu0 0.0
      %177 = vmatpush1.msra.mxu0 0.0
      %178 = vmatprep.subr.mxu0 0.0
      %179 = vmatpush1.msra.mxu0 0.0
      %180 = vmatprep.subr.mxu0 0.0
      %181 = vmatpush1.msra.mxu0 0.0
      %182 = vmatprep.subr.mxu0 0.0
      %183 = vmatpush1.msra.mxu0 0.0
      %184 = vmatprep.subr.mxu0 0.0
      %185 = vmatpush1.msra.mxu0 0.0
      %186 = vmatprep.subr.mxu0 0.0
      %187 = vmatpush1.msra.mxu0 0.0
      %188 = vmatprep.subr.mxu0 0.0
      %189 = vmatpush1.msra.mxu0 0.0
      %190 = vmatprep.subr.mxu0 0.0
      %191 = vmatpush1.msra.mxu0 0.0
      %192 = vmatprep.subr.mxu0 0.0
      %193 = vmatpush1.msra.mxu0 0.0
      %194 = vmatprep.subr.mxu0 0.0
      %195 = vmatpush1.msra.mxu0 0.0
      %196 = vmatprep.subr.mxu0 0.0
      %197 = vmatpush1.msra.mxu0 0.0
      %198 = vmatprep.subr.mxu0 0.0
      %199 = vmatpush1.msra.mxu0 0.0
      %200 = vmatprep.mubr.f32.mxu0 0.0
      %201 = vmatmul.mubr.f32.gmra.mrb[0].mxu0 %v130
      %v202 = vpop.f32.mrb[0].mxu0
      %v203 = vadd.f32 %v126, %v202
      %v204 = vpop.f32.mrb[0].mxu0
      %205 = vdwg.mxu0
      %v206 = vxor.u32 %v203, 2147483648
      %v207 = vmul.f32 %v206, 1.442695
      %v208 = vpow.pop %v207
      %v209 = vadd.f32 %v208, 1.0
      %v210 = vrcp.pop %v209
      %v211 = vmul.f32 1.0, %v210
      %v212 = vmul.f32 %v203, %v211
      %v213 = vld [vmem:[#allocation9] sm:$0xff]
      %v214 = vld [vmem:[#allocation11] sm:$0x1]
      %v216 = vlaneseq
      %v217 = vshrl.u32 %v216, 7
      %v218 = vsub.s32 0, %v217
      %v219 = vrot.slane %v214, %v218
      %vm221 = vcmask 64512
      %v223 = vsel %vm221, %v212, 0
      %225 = vmatprep.subr.mxu0 0.0
      %226 = vmatpush1.msra.mxu0 %v213
      %227 = vmatprep.subr.mxu0 0.0
      %228 = vmatpush1.msra.mxu0 0.0
      %229 = vmatprep.subr.mxu0 0.0
      %230 = vmatpush1.msra.mxu0 0.0
      %231 = vmatprep.subr.mxu0 0.0
      %232 = vmatpush1.msra.mxu0 0.0
      %233 = vmatprep.subr.mxu0 0.0
      %234 = vmatpush1.msra.mxu0 0.0
      %235 = vmatprep.subr.mxu0 0.0
      %236 = vmatpush1.msra.mxu0 0.0
      %237 = vmatprep.subr.mxu0 0.0
      %238 = vmatpush1.msra.mxu0 0.0
      %239 = vmatprep.subr.mxu0 0.0
      %240 = vmatpush1.msra.mxu0 0.0
      %241 = vmatprep.subr.mxu0 0.0
      %242 = vmatpush1.msra.mxu0 0.0
      %243 = vmatprep.subr.mxu0 0.0
      %244 = vmatpush1.msra.mxu0 0.0
      %245 = vmatprep.subr.mxu0 0.0
      %246 = vmatpush1.msra.mxu0 0.0
      %247 = vmatprep.subr.mxu0 0.0
      %248 = vmatpush1.msra.mxu0 0.0
      %249 = vmatprep.subr.mxu0 0.0
      %250 = vmatpush1.msra.mxu0 0.0
      %251 = vmatprep.subr.mxu0 0.0
      %252 = vmatpush1.msra.mxu0 0.0
      %253 = vmatprep.subr.mxu0 0.0
      %254 = vmatpush1.msra.mxu0 0.0
      %255 = vmatprep.subr.mxu0 0.0
      %256 = vmatpush1.msra.mxu0 0.0
      %257 = vmatprep.subr.mxu0 0.0
      %258 = vmatpush1.msra.mxu0 0.0
      %259 = vmatprep.subr.mxu0 0.0
      %260 = vmatpush1.msra.mxu0 0.0
      %261 = vmatprep.subr.mxu0 0.0
      %262 = vmatpush1.msra.mxu0 0.0
      %263 = vmatprep.subr.mxu0 0.0
      %264 = vmatpush1.msra.mxu0 0.0
      %265 = vmatprep.subr.mxu0 0.0
      %266 = vmatpush1.msra.mxu0 0.0
      %267 = vmatprep.subr.mxu0 0.0
      %268 = vmatpush1.msra.mxu0 0.0
      %269 = vmatprep.subr.mxu0 0.0
      %270 = vmatpush1.msra.mxu0 0.0
      %271 = vmatprep.subr.mxu0 0.0
      %272 = vmatpush1.msra.mxu0 0.0
      %273 = vmatprep.subr.mxu0 0.0
      %274 = vmatpush1.msra.mxu0 0.0
      %275 = vmatprep.subr.mxu0 0.0
      %276 = vmatpush1.msra.mxu0 0.0
      %277 = vmatprep.subr.mxu0 0.0
      %278 = vmatpush1.msra.mxu0 0.0
      %279 = vmatprep.subr.mxu0 0.0
      %280 = vmatpush1.msra.mxu0 0.0
      %281 = vmatprep.subr.mxu0 0.0
      %282 = vmatpush1.msra.mxu0 0.0
      %283 = vmatprep.subr.mxu0 0.0
      %284 = vmatpush1.msra.mxu0 0.0
      %285 = vmatprep.subr.mxu0 0.0
      %286 = vmatpush1.msra.mxu0 0.0
      %287 = vmatprep.subr.mxu0 0.0
      %288 = vmatpush1.msra.mxu0 0.0
      %289 = vmatprep.mubr.f32.mxu0 0.0
      %290 = vmatmul.mubr.f32.gmra.mrb[0].mxu0 %v223
      %v291 = vpop.f32.mrb[0].mxu0
      %v292 = vadd.f32 %v219, %v291
      %v293 = vpop.f32.mrb[0].mxu0
      %294 = vdwg.mxu0
      %v295 = vxor.u32 %v292, 2147483648
      %v296 = vmul.f32 %v295, 1.442695
      %v297 = vpow.pop %v296
      %v298 = vadd.f32 %v297, 1.0
      %v299 = vrcp.pop %v298
      %v300 = vmul.f32 1.0, %v299
      %301 = vst.msk [vmem:[#allocation12] sm:$0x3] %vm113, %v300
    $region49: #{tpu_custom_call.1} parent=1 // pred_fallthru
      _
    // Predicated region
    $region50: #{tpu_custom_call.1} parent=1 // pred_check
      _
    $region51: #{tpu_custom_call.1} parent=1 // pred_check_branch
      %303 = sbr.rel (0) target = $region53
    $region52: #{tpu_custom_call.1} parent=1 // pred_region
      %s305 = ssub.s32 32, 32
      %306 = vsyncadd [#allocation5], %s305
      %s308 = sshll.u32 [#allocation12], 4
      %s309 = int_to_ptr.vmem [resolvable:$true] %s308
      %311 = dma.vmem_to_hbm [thread:$0]  %s309, 32, %s5, [#allocation5]
    $region53: #{tpu_custom_call.1} parent=1 // pred_fallthru
      _
    // Predicated region
    $region54: #{tpu_custom_call.1} parent=1 // pred_check
      _
    $region55: #{tpu_custom_call.1} parent=1 // pred_check_branch
      %313 = sbr.rel (0) target = $region57
    $region56: #{tpu_custom_call.1} parent=1 // pred_region
      %314 = dma.done [#allocation5], 32
    $region57: #{tpu_custom_call.1} parent=1 // pred_fallthru
      _
    %315 = vsyncpa [#allocation4], 1
    %316 = vsyncpa [#allocation7], 1
    %317 = vsyncpa [#allocation10], 1
    %318 = vsyncpa [#allocation5], 1

</llo_original>
